<compile_context>
chip_gen: v5e
topology: v5e:2x2
jax: 0.10.0
libtpu: 0.0.40
codegen_flags: <defaults>
</compile_context>

<pallas_src>
import functools

import jax
import jax.numpy as jnp
from jax.experimental import pallas as pl
from jax.experimental.pallas import tpu as pltpu

LANE = 128  # vreg lane width: node dim AND feature dims are padded to this


def _round_up(x, m):
    return (x + m - 1) // m * m


def gcn_fused_kernel(adj_ref, nsrc_ref, ndst_ref, x_ref, *refs,
                     layer_dims, relu_flags):
    """Entire multi-layer GCN forward in one kernel invocation (no grid).

    refs = (w0, b0, w1, b1, ..., out_ref); layer_dims (padded) / relu_flags static.
    """
    out_ref = refs[-1]
    wb_refs = refs[:-1]

    adj = adj_ref[...]          # bf16 (Np, Np), 0/1 exact; stays bf16 (MXU-native LHS)
    nsrc = nsrc_ref[...]        # f32 (Np, 1): rsqrt(max(out_deg, 1)) per src node
    ndst = ndst_ref[...]        # f32 (Np, 1): rsqrt(max(in_deg, 1))  per dst node

    def aggregate(hh):
        # norm='both' aggregation with the diagonal scalings folded into h
        # (no NxN a_norm is ever materialized). bf16 x bf16 MXU matmul, f32 acc.
        hs = (hh * nsrc).astype(jnp.bfloat16)
        return jnp.dot(adj, hs, preferred_element_type=jnp.float32) * ndst

    h = x_ref[...]              # f32, stays resident in VMEM/vregs across layers
    for l, (fin_p, fout_p) in enumerate(layer_dims):
        w = wb_refs[2 * l][...]
        b = wb_refs[2 * l + 1][...]
        if fin_p > fout_p:
            # DGL GraphConv ordering optimization, decided on PADDED dims.
            h = jnp.dot(h, w, preferred_element_type=jnp.float32)
            h = aggregate(h) + b
        else:
            h = aggregate(h)
            h = jnp.dot(h, w, preferred_element_type=jnp.float32) + b
        if relu_flags[l]:
            h = jnp.maximum(h, 0.0)
        # NOTE: padded node ROWS pick up the bias (and relu(bias)) here. This is
        # harmless because padded SRC columns of adj are zero (so they never feed
        # real nodes) and padded dst rows are sliced off in the wrapper — do NOT
        # rely on padded rows being zero.
        # TODO(synk): training-mode dropout (pltpu.prng_*) not implemented;
        #             eval-mode dropout is the identity.
    out_ref[...] = h.astype(out_ref.dtype)


class GCNPallas:
    """Mirrors enter/dglenter GCN: stack of GraphConv layers, relu+dropout between."""

    def __init__(self, data_info, hidden_size=16, num_layers=1, key=None):
        # TODO(synk): embed_size > 0 (nn.Embedding table) and use_edge_weight=True
        #             paths are not implemented (defaults in the reference module).
        #             The bf16 adjacency trick is exact only for 0/1 edges; weighted
        #             edges would need f32 (or separately applied weights).
        self.data_info = data_info
        in_size = data_info["in_size"]
        key = key if key is not None else jax.random.PRNGKey(0)

        self.params = []            # unpadded (w, b) — the model definition
        self._layer_dims_pad = []   # padded (fin_p, fout_p) per layer
        self._wb_padded = []        # padded f32 weights/biases, built ONCE
        for i in range(num_layers):
            in_hidden = hidden_size if i > 0 else in_size
            out_hidden = hidden_size if i < num_layers - 1 else data_info["out_size"]
            key, kw = jax.random.split(key)
            limit = (6.0 / (in_hidden + out_hidden)) ** 0.5  # glorot-uniform-ish
            w = jax.random.uniform(
                kw, (in_hidden, out_hidden), jnp.float32, -limit, limit)
            b = jnp.zeros((out_hidden,), jnp.float32)
            self.params.append((w, b))

            fin_p = _round_up(in_hidden, LANE)
            fout_p = _round_up(out_hidden, LANE)
            self._layer_dims_pad.append((fin_p, fout_p))
            w_p = jnp.zeros((fin_p, fout_p), jnp.float32)
            w_p = w_p.at[:in_hidden, :out_hidden].set(w)
            b_p = jnp.zeros((1, fout_p), jnp.float32).at[0, :out_hidden].set(b)
            self._wb_padded += [w_p, b_p]

        self._relu_flags = tuple(l != num_layers - 1 for l in range(num_layers))
        self._graph_key = None
        self._graph_prep = None

    # ----- one-time graph preprocessing, cached across forward() calls -----
    def prepare_graph(self, adj):
        n = int(adj.shape[0])
        n_pad = _round_up(max(n, LANE), LANE)

        adj_f32 = adj.astype(jnp.float32)
        # Degree sums accumulate in f32 (bf16 accumulation is inexact above 256).
        deg_out = jnp.sum(adj_f32, axis=0)                      # (N,) src out-degree
        deg_in = jnp.sum(adj_f32, axis=1)                       # (N,) dst in-degree
        norm_src = jax.lax.rsqrt(jnp.maximum(deg_out, 1.0))     # DGL clamps deg >= 1
        norm_dst = jax.lax.rsqrt(jnp.maximum(deg_in, 1.0))

        adj_p = jnp.zeros((n_pad, n_pad), jnp.bfloat16).at[:n, :n].set(
            adj.astype(jnp.bfloat16))                           # 0/1 exact in bf16
        nsrc_p = jnp.ones((n_pad, 1), jnp.float32).at[:n, 0].set(norm_src)
        ndst_p = jnp.ones((n_pad, 1), jnp.float32).at[:n, 0].set(norm_dst)

        self._graph_key = id(adj)
        self._graph_prep = (n, n_pad, adj_p, nsrc_p, ndst_p)
        return self._graph_prep

    def forward(self, adj, node_feat):
        if self._graph_prep is None or self._graph_key != id(adj):
            self.prepare_graph(adj)
        n, n_pad, adj_p, nsrc_p, ndst_p = self._graph_prep

        fin0 = self.params[0][0].shape[0]
        fout_last = self.params[-1][0].shape[1]
        fin0_pad = self._layer_dims_pad[0][0]
        fout_last_pad = self._layer_dims_pad[-1][1]

        # Per-call work: only the node features are padded.
        x_p = jnp.zeros((n_pad, fin0_pad), jnp.float32).at[:n, :fin0].set(
            node_feat.astype(jnp.float32))

        kernel = functools.partial(
            gcn_fused_kernel,
            layer_dims=tuple(self._layer_dims_pad),
            relu_flags=self._relu_flags)

        # Explicit scoped-VMEM budget from the actual buffers (cap: 64 MiB so the
        # same setting is valid on v7x's smaller per-TC VMEM).
        max_f_pad = max(max(d) for d in self._layer_dims_pad)
        vmem_bytes = (
            n_pad * n_pad * 2                 # adj (bf16)
            + 2 * n_pad * 4                   # norm vectors
            + n_pad * fin0_pad * 4            # x
            + n_pad * fout_last_pad * 4       # out
            + sum(a.size * 4 for a in self._wb_padded)
            + 3 * n_pad * max_f_pad * 4)      # resident h + bf16/f32 temporaries
        vmem_limit = int(min(64 * 1024 * 1024, max(32 * 1024 * 1024, 2 * vmem_bytes)))

        n_inputs = 4 + len(self._wb_padded)
        out_pad = pl.pallas_call(
            kernel,
            out_shape=jax.ShapeDtypeStruct((n_pad, fout_last_pad), jnp.float32),
            # Small graph: whole arrays live in VMEM as single blocks (no grid).
            in_specs=[pl.BlockSpec(memory_space=pltpu.MemorySpace.VMEM)] * n_inputs,
            out_specs=pl.BlockSpec(memory_space=pltpu.MemorySpace.VMEM),
            compiler_params=pltpu.CompilerParams(vmem_limit_bytes=vmem_limit),
        )(adj_p, nsrc_p, ndst_p, x_p, *self._wb_padded)

        return out_pad[:n, :fout_last]


def gcn_reference(adj, x, params):
    """Pure-JAX f32 reference with the original (un-reordered) DGL math."""
    adj = adj.astype(jnp.float32)
    norm_src = 1.0 / jnp.sqrt(jnp.maximum(jnp.sum(adj, axis=0), 1.0))   # (N,) src
    norm_dst = 1.0 / jnp.sqrt(jnp.maximum(jnp.sum(adj, axis=1), 1.0))   # (N,) dst
    h = x.astype(jnp.float32)
    for l, (w, b) in enumerate(params):
        h = h * norm_src[:, None]
        h = adj @ h
        h = h * norm_dst[:, None]
        h = h @ w + b
        if l != len(params) - 1:
            h = jnp.maximum(h, 0.0)
    return h


if __name__ == "__main__":
    key = jax.random.PRNGKey(0)
    k_adj, k_feat, k_params = jax.random.split(key, 3)

    num_nodes = 64
    in_size = 32
    hidden_size = 32
    out_size = 16

    data_info = {"num_nodes": num_nodes, "in_size": in_size, "out_size": out_size}

    # Deterministic random graph (dense adjacency, [dst, src]).
    adj = jax.random.bernoulli(
        k_adj, p=0.1, shape=(num_nodes, num_nodes)).astype(jnp.float32)
    node_feat = jax.random.normal(k_feat, (num_nodes, in_size), jnp.float32)

    model = GCNPallas(data_info, hidden_size=hidden_size, num_layers=2, key=k_params)
    out = jax.block_until_ready(model.forward(adj, node_feat))
    # Second call exercises the cached-graph fast path (no re-padding of adj/norms).
    out2 = jax.block_until_ready(model.forward(adj, node_feat))

    assert out.shape == (num_nodes, out_size)
    assert bool(jnp.all(jnp.isfinite(out)))
    assert bool(jnp.allclose(out, out2))

    ref = gcn_reference(adj, node_feat, model.params)
    max_err = float(jnp.max(jnp.abs(out - ref)))
    # Aggregation uses bf16 operands on the MXU (f32 accumulation), so compare
    # against the pure-f32 reference with a ~1% budget.
    assert bool(jnp.allclose(out, ref, rtol=1e-2, atol=1e-2)), max_err

    print("KERNEL_OK")
</pallas_src>

<mosaic_0001>
module attributes {stable_mosaic.version = 11 : i64} {
  func.func @gcn_fused_kernel(%arg0: memref<128x128xbf16, #tpu.memory_space<vmem>>, %arg1: memref<128x1xf32, #tpu.memory_space<vmem>>, %arg2: memref<128x1xf32, #tpu.memory_space<vmem>>, %arg3: memref<128x128xf32, #tpu.memory_space<vmem>>, %arg4: memref<128x128xf32, #tpu.memory_space<vmem>>, %arg5: memref<1x128xf32, #tpu.memory_space<vmem>>, %arg6: memref<128x128xf32, #tpu.memory_space<vmem>>, %arg7: memref<1x128xf32, #tpu.memory_space<vmem>>, %arg8: memref<128x128xf32, #tpu.memory_space<vmem>>) attributes {dimension_semantics = [], scalar_prefetch = 0 : i64, scratch_operands = 0 : i64, tpu.core_type = #tpu.core_type<tc>} {
    %c0 = arith.constant 0 : index
    %c0_0 = arith.constant 0 : index
    %0 = vector.load %arg0[%c0, %c0_0] : memref<128x128xbf16, #tpu.memory_space<vmem>>, vector<128x128xbf16>
    %c0_1 = arith.constant 0 : index
    %c0_2 = arith.constant 0 : index
    %1 = vector.load %arg1[%c0_1, %c0_2] : memref<128x1xf32, #tpu.memory_space<vmem>>, vector<128x1xf32>
    %c0_3 = arith.constant 0 : index
    %c0_4 = arith.constant 0 : index
    %2 = vector.load %arg2[%c0_3, %c0_4] : memref<128x1xf32, #tpu.memory_space<vmem>>, vector<128x1xf32>
    %c0_5 = arith.constant 0 : index
    %c0_6 = arith.constant 0 : index
    %3 = vector.load %arg3[%c0_5, %c0_6] : memref<128x128xf32, #tpu.memory_space<vmem>>, vector<128x128xf32>
    %c0_7 = arith.constant 0 : index
    %c0_8 = arith.constant 0 : index
    %4 = vector.load %arg4[%c0_7, %c0_8] : memref<128x128xf32, #tpu.memory_space<vmem>>, vector<128x128xf32>
    %c0_9 = arith.constant 0 : index
    %c0_10 = arith.constant 0 : index
    %5 = vector.load %arg5[%c0_9, %c0_10] : memref<1x128xf32, #tpu.memory_space<vmem>>, vector<1x128xf32>
    %6 = vector.broadcast %1 : vector<128x1xf32> to vector<128x128xf32>
    %7 = arith.mulf %3, %6 : vector<128x128xf32>
    %8 = arith.truncf %7 : vector<128x128xf32> to vector<128x128xbf16>
    %cst = arith.constant dense<0.000000e+00> : vector<128x128xf32>
    %9 = tpu.matmul %0, %8, %cst {dimension_numbers = #tpu.dot_dimension_numbers<[1], [0], [0], [1], [0, 0, 1, 1], [], []>} : vector<128x128xbf16>, vector<128x128xbf16>, vector<128x128xf32> -> vector<128x128xf32>
    %10 = vector.broadcast %2 : vector<128x1xf32> to vector<128x128xf32>
    %11 = arith.mulf %9, %10 : vector<128x128xf32>
    %cst_11 = arith.constant dense<0.000000e+00> : vector<128x128xf32>
    %12 = tpu.matmul %11, %4, %cst_11 {dimension_numbers = #tpu.dot_dimension_numbers<[1], [0], [0], [1], [0, 0, 1, 1], [], []>} : vector<128x128xf32>, vector<128x128xf32>, vector<128x128xf32> -> vector<128x128xf32>
    %13 = vector.broadcast %5 : vector<1x128xf32> to vector<128x128xf32>
    %14 = arith.addf %12, %13 : vector<128x128xf32>
    %cst_12 = arith.constant 0.000000e+00 : f32
    %15 = vector.broadcast %cst_12 : f32 to vector<128x128xf32>
    %16 = arith.maximumf %14, %15 : vector<128x128xf32>
    %c0_13 = arith.constant 0 : index
    %c0_14 = arith.constant 0 : index
    %17 = vector.load %arg6[%c0_13, %c0_14] : memref<128x128xf32, #tpu.memory_space<vmem>>, vector<128x128xf32>
    %c0_15 = arith.constant 0 : index
    %c0_16 = arith.constant 0 : index
    %18 = vector.load %arg7[%c0_15, %c0_16] : memref<1x128xf32, #tpu.memory_space<vmem>>, vector<1x128xf32>
    %19 = vector.broadcast %1 : vector<128x1xf32> to vector<128x128xf32>
    %20 = arith.mulf %16, %19 : vector<128x128xf32>
    %21 = arith.truncf %20 : vector<128x128xf32> to vector<128x128xbf16>
    %cst_17 = arith.constant dense<0.000000e+00> : vector<128x128xf32>
    %22 = tpu.matmul %0, %21, %cst_17 {dimension_numbers = #tpu.dot_dimension_numbers<[1], [0], [0], [1], [0, 0, 1, 1], [], []>} : vector<128x128xbf16>, vector<128x128xbf16>, vector<128x128xf32> -> vector<128x128xf32>
    %23 = vector.broadcast %2 : vector<128x1xf32> to vector<128x128xf32>
    %24 = arith.mulf %22, %23 : vector<128x128xf32>
    %cst_18 = arith.constant dense<0.000000e+00> : vector<128x128xf32>
    %25 = tpu.matmul %24, %17, %cst_18 {dimension_numbers = #tpu.dot_dimension_numbers<[1], [0], [0], [1], [0, 0, 1, 1], [], []>} : vector<128x128xf32>, vector<128x128xf32>, vector<128x128xf32> -> vector<128x128xf32>
    %26 = vector.broadcast %18 : vector<1x128xf32> to vector<128x128xf32>
    %27 = arith.addf %25, %26 : vector<128x128xf32>
    %c0_19 = arith.constant 0 : index
    %c0_20 = arith.constant 0 : index
    %28 = vector.load %arg8[%c0_19, %c0_20] : memref<128x128xf32, #tpu.memory_space<vmem>>, vector<128x128xf32>
    tpu.vector_store %arg8[%c0_19, %c0_20], %27 {strides = array<i32>} : memref<128x128xf32, #tpu.memory_space<vmem>>, vector<128x128xf32>,
    return
  }
}

</mosaic_0001>

<llo_original>
// kernel: tpu_custom_call.1
$region0: #{tpu_custom_call.1}
  #allocation0 [shape = 'u32[]', space=smem, size = 0x4, offset = 0x4, fixed_abs, tag = 'smem constant byte address 0x4 - core index']
  #allocation1 [shape = 'u32[72,128]{1,0:T(1,128)}', space=vmem, size = 0x9000, scoped, tag = 'internal scratch']
  %s0 = inlined_call_operand.hbm [shape: bf16[128,128], index: 0, kind: input, shape index: {}]
  %s1 = inlined_call_operand.vmem [shape: f32[128,1], index: 1, kind: input, shape index: {}]
  %s2 = inlined_call_operand.vmem [shape: f32[128,1], index: 2, kind: input, shape index: {}]
  %s3 = inlined_call_operand.vmem [shape: f32[128,128], index: 3, kind: input, shape index: {}]
  %s4 = inlined_call_operand.vmem [shape: f32[128,128], index: 4, kind: input, shape index: {}]
  %s5 = inlined_call_operand.vmem [shape: f32[1,128], index: 5, kind: input, shape index: {}]
  %s6 = inlined_call_operand.hbm [shape: f32[128,128], index: 6, kind: input, shape index: {}]
  %s7 = inlined_call_operand.vmem [shape: f32[1,128], index: 7, kind: input, shape index: {}]
  %s8 = inlined_call_operand.hbm [shape: f32[128,128], index: 8, kind: output, shape index: {}]
  %s9 = sld [smem:[#allocation0]]
  $region50: #{tpu_custom_call.1} parent=0
    _
  %s11 = ssub.s32 1, %s9
  %s12 = scalar_select 0, %s11, %s9
  $region1: #{tpu_custom_call.1} parent=0
    #allocation2 [shape = 'u8[32768]{0}', space=vmem, size = 0x8000, scoped, tag = 'input window, operand 0, single buffered']
    #allocation3 [shape = 's32[1]{0}', space=sflag, size = 0x4, scoped, tag = 'scoped memory for tpu_custom_call.1']
    #allocation4 [shape = 's32[1]{0}', space=sflag, size = 0x4, scoped, tag = 'scoped memory for tpu_custom_call.1']
    #allocation5 [shape = 'u8[65536]{0}', space=vmem, size = 0x10000, scoped, tag = 'input window, operand 6, single buffered']
    #allocation6 [shape = 's32[1]{0}', space=sflag, size = 0x4, scoped, tag = 'scoped memory for tpu_custom_call.1']
    #allocation7 [shape = 'u8[65536]{0}', space=vmem, size = 0x10000, scoped, tag = 'output window, operand 0, single buffered']
    %13 = vsyncpa [#allocation3], 0
    %14 = vsyncpa [#allocation6], 0
    %15 = vsyncpa [#allocation4], 0
    // Predicated region
    $region2: #{tpu_custom_call.1} parent=1 // pred_check
      _
    $region3: #{tpu_custom_call.1} parent=1 // pred_check_branch
      %17 = sbr.rel (0) target = $region5
    $region4: #{tpu_custom_call.1} parent=1 // pred_region
      %19 = vsyncadd [#allocation3], 0
      %s20 = sshll.u32 %s0, 4
      %s21 = int_to_ptr.hbm [resolvable:$true] %s20
      %s22 = sshll.u32 [#allocation2], 4
      %s23 = int_to_ptr.vmem [resolvable:$true] %s22
      %28 = dma.hbm_to_vmem [thread:$0]  %s21, 1024, %s23, [#allocation3], 64, 64, 4
    $region5: #{tpu_custom_call.1} parent=1 // pred_fallthru
      _
    // Predicated region
    $region6: #{tpu_custom_call.1} parent=1 // pred_check
      _
    $region7: #{tpu_custom_call.1} parent=1 // pred_check_branch
      %30 = sbr.rel (0) target = $region9
    $region8: #{tpu_custom_call.1} parent=1 // pred_region
      _
    $region9: #{tpu_custom_call.1} parent=1 // pred_fallthru
      _
    // Predicated region
    $region10: #{tpu_custom_call.1} parent=1 // pred_check
      _
    $region11: #{tpu_custom_call.1} parent=1 // pred_check_branch
      %32 = sbr.rel (0) target = $region13
    $region12: #{tpu_custom_call.1} parent=1 // pred_region
      _
    $region13: #{tpu_custom_call.1} parent=1 // pred_fallthru
      _
    // Predicated region
    $region14: #{tpu_custom_call.1} parent=1 // pred_check
      _
    $region15: #{tpu_custom_call.1} parent=1 // pred_check_branch
      %34 = sbr.rel (0) target = $region17
    $region16: #{tpu_custom_call.1} parent=1 // pred_region
      _
    $region17: #{tpu_custom_call.1} parent=1 // pred_fallthru
      _
    // Predicated region
    $region18: #{tpu_custom_call.1} parent=1 // pred_check
      _
    $region19: #{tpu_custom_call.1} parent=1 // pred_check_branch
      %36 = sbr.rel (0) target = $region21
    $region20: #{tpu_custom_call.1} parent=1 // pred_region
      _
    $region21: #{tpu_custom_call.1} parent=1 // pred_fallthru
      _
    // Predicated region
    $region22: #{tpu_custom_call.1} parent=1 // pred_check
      _
    $region23: #{tpu_custom_call.1} parent=1 // pred_check_branch
      %38 = sbr.rel (0) target = $region25
    $region24: #{tpu_custom_call.1} parent=1 // pred_region
      _
    $region25: #{tpu_custom_call.1} parent=1 // pred_fallthru
      _
    // Predicated region
    $region26: #{tpu_custom_call.1} parent=1 // pred_check
      _
    $region27: #{tpu_custom_call.1} parent=1 // pred_check_branch
      %40 = sbr.rel (0) target = $region29
    $region28: #{tpu_custom_call.1} parent=1 // pred_region
      %42 = vsyncadd [#allocation6], 0
      %s43 = sshll.u32 %s6, 4
      %s44 = int_to_ptr.hbm [resolvable:$true] %s43
      %s45 = sshll.u32 [#allocation5], 4
      %s46 = int_to_ptr.vmem [resolvable:$true] %s45
      %51 = dma.hbm_to_vmem [thread:$0]  %s44, 2048, %s46, [#allocation6], 128, 128, 8
    $region29: #{tpu_custom_call.1} parent=1 // pred_fallthru
      _
    // Predicated region
    $region30: #{tpu_custom_call.1} parent=1 // pred_check
      _
    $region31: #{tpu_custom_call.1} parent=1 // pred_check_branch
      %53 = sbr.rel (0) target = $region33
    $region32: #{tpu_custom_call.1} parent=1 // pred_region
      _
    $region33: #{tpu_custom_call.1} parent=1 // pred_fallthru
      _
    // Predicated region
    $region34: #{tpu_custom_call.1} parent=1 // pred_check
      _
    $region35: #{tpu_custom_call.1} parent=1 // pred_check_branch
      %55 = sbr.rel (0) target = $region37
    $region36: #{tpu_custom_call.1} parent=1 // pred_region
      %57 = dma.done [#allocation3], 1024
    $region37: #{tpu_custom_call.1} parent=1 // pred_fallthru
      _
    // Predicated region
    $region38: #{tpu_custom_call.1} parent=1 // pred_check
      _
    $region39: #{tpu_custom_call.1} parent=1 // pred_check_branch
      %59 = sbr.rel (0) target = $region41
    $region40: #{tpu_custom_call.1} parent=1 // pred_region
      %61 = dma.done [#allocation6], 2048
    $region41: #{tpu_custom_call.1} parent=1 // pred_fallthru
      _
    %v62 = vld [vmem:[#allocation2] sm:$0xf]
    %v63 = vld [vmem:[#allocation2 + $0x4] sm:$0xf]
    %v64 = vld [vmem:[#allocation2 + $0x8] sm:$0xf]
    %v65 = vld [vmem:[#allocation2 + $0xc] sm:$0xf]
    %v66 = vld [vmem:[#allocation2 + $0x10] sm:$0xf]
    %v67 = vld [vmem:[#allocation2 + $0x14] sm:$0xf]
    %v68 = vld [vmem:[#allocation2 + $0x18] sm:$0xf]
    %v69 = vld [vmem:[#allocation2 + $0x1c] sm:$0xf]
    %v70 = vld [vmem:[#allocation2 + $0x20] sm:$0xf]
    %v71 = vld [vmem:[#allocation2 + $0x24] sm:$0xf]
    %v72 = vld [vmem:[#allocation2 + $0x28] sm:$0xf]
    %v73 = vld [vmem:[#allocation2 + $0x2c] sm:$0xf]
    %v74 = vld [vmem:[#allocation2 + $0x30] sm:$0xf]
    %v75 = vld [vmem:[#allocation2 + $0x34] sm:$0xf]
    %v76 = vld [vmem:[#allocation2 + $0x38] sm:$0xf]
    %v77 = vld [vmem:[#allocation2 + $0x3c] sm:$0xf]
    %v78 = vld [vmem:[%s1] sm:$0xff]
    %v79 = vld [vmem:[%s1 + $0x8] sm:$0xff]
    %v80 = vld [vmem:[%s1 + $0x10] sm:$0xff]
    %v81 = vld [vmem:[%s1 + $0x18] sm:$0xff]
    %v82 = vld [vmem:[%s1 + $0x20] sm:$0xff]
    %v83 = vld [vmem:[%s1 + $0x28] sm:$0xff]
    %v84 = vld [vmem:[%s1 + $0x30] sm:$0xff]
    %v85 = vld [vmem:[%s1 + $0x38] sm:$0xff]
    %v86 = vld [vmem:[%s1 + $0x40] sm:$0xff]
    %v87 = vld [vmem:[%s1 + $0x48] sm:$0xff]
    %v88 = vld [vmem:[%s1 + $0x50] sm:$0xff]
    %v89 = vld [vmem:[%s1 + $0x58] sm:$0xff]
    %v90 = vld [vmem:[%s1 + $0x60] sm:$0xff]
    %v91 = vld [vmem:[%s1 + $0x68] sm:$0xff]
    %v92 = vld [vmem:[%s1 + $0x70] sm:$0xff]
    %v93 = vld [vmem:[%s1 + $0x78] sm:$0xff]
    %v94 = vld [vmem:[%s2] sm:$0xff]
    %v95 = vld [vmem:[%s2 + $0x8] sm:$0xff]
    %v96 = vld [vmem:[%s2 + $0x10] sm:$0xff]
    %v97 = vld [vmem:[%s2 + $0x18] sm:$0xff]
    %v98 = vld [vmem:[%s2 + $0x20] sm:$0xff]
    %v99 = vld [vmem:[%s2 + $0x28] sm:$0xff]
    %v100 = vld [vmem:[%s2 + $0x30] sm:$0xff]
    %v101 = vld [vmem:[%s2 + $0x38] sm:$0xff]
    %v102 = vld [vmem:[%s2 + $0x40] sm:$0xff]
    %v103 = vld [vmem:[%s2 + $0x48] sm:$0xff]
    %v104 = vld [vmem:[%s2 + $0x50] sm:$0xff]
    %v105 = vld [vmem:[%s2 + $0x58] sm:$0xff]
    %v106 = vld [vmem:[%s2 + $0x60] sm:$0xff]
    %v107 = vld [vmem:[%s2 + $0x68] sm:$0xff]
    %v108 = vld [vmem:[%s2 + $0x70] sm:$0xff]
    %v109 = vld [vmem:[%s2 + $0x78] sm:$0xff]
    %v110 = vld [vmem:[%s3] sm:$0xff]
    %v111 = vld [vmem:[%s3 + $0x8] sm:$0xff]
    %v112 = vld [vmem:[%s3 + $0x10] sm:$0xff]
    %v113 = vld [vmem:[%s3 + $0x18] sm:$0xff]
    %v114 = vld [vmem:[%s3 + $0x20] sm:$0xff]
    %v115 = vld [vmem:[%s3 + $0x28] sm:$0xff]
    %v116 = vld [vmem:[%s3 + $0x30] sm:$0xff]
    %v117 = vld [vmem:[%s3 + $0x38] sm:$0xff]
    %v118 = vld [vmem:[%s3 + $0x40] sm:$0xff]
    %v119 = vld [vmem:[%s3 + $0x48] sm:$0xff]
    %v120 = vld [vmem:[%s3 + $0x50] sm:$0xff]
    %v121 = vld [vmem:[%s3 + $0x58] sm:$0xff]
    %v122 = vld [vmem:[%s3 + $0x60] sm:$0xff]
    %v123 = vld [vmem:[%s3 + $0x68] sm:$0xff]
    %v124 = vld [vmem:[%s3 + $0x70] sm:$0xff]
    %v125 = vld [vmem:[%s3 + $0x78] sm:$0xff]
    %v126 = vld [vmem:[%s4] sm:$0xff]
    %v127 = vld [vmem:[%s4 + $0x8] sm:$0xff]
    %v128 = vld [vmem:[%s4 + $0x10] sm:$0xff]
    %v129 = vld [vmem:[%s4 + $0x18] sm:$0xff]
    %v130 = vld [vmem:[%s4 + $0x20] sm:$0xff]
    %v131 = vld [vmem:[%s4 + $0x28] sm:$0xff]
    %v132 = vld [vmem:[%s4 + $0x30] sm:$0xff]
    %v133 = vld [vmem:[%s4 + $0x38] sm:$0xff]
    %v134 = vld [vmem:[%s4 + $0x40] sm:$0xff]
    %v135 = vld [vmem:[%s4 + $0x48] sm:$0xff]
    %v136 = vld [vmem:[%s4 + $0x50] sm:$0xff]
    %v137 = vld [vmem:[%s4 + $0x58] sm:$0xff]
    %v138 = vld [vmem:[%s4 + $0x60] sm:$0xff]
    %v139 = vld [vmem:[%s4 + $0x68] sm:$0xff]
    %v140 = vld [vmem:[%s4 + $0x70] sm:$0xff]
    %v141 = vld [vmem:[%s4 + $0x78] sm:$0xff]
    %v142 = vld [vmem:[%s5] sm:$0x1]
    %144 = vset.pattern.permute.xlu0 0
    %145 = vperm.xlu0 %144, %v78
    %v146 = vpop.permute.xlu0 %145
    %149 = vset.pattern.permute.xlu0 0
    %150 = vperm.xlu0 %149, %v79
    %v151 = vpop.permute.xlu0 %150
    %154 = vset.pattern.permute.xlu0 0
    %155 = vperm.xlu0 %154, %v80
    %v156 = vpop.permute.xlu0 %155
    %159 = vset.pattern.permute.xlu0 0
    %160 = vperm.xlu0 %159, %v81
    %v161 = vpop.permute.xlu0 %160
    %164 = vset.pattern.permute.xlu0 0
    %165 = vperm.xlu0 %164, %v82
    %v166 = vpop.permute.xlu0 %165
    %169 = vset.pattern.permute.xlu0 0
    %170 = vperm.xlu0 %169, %v83
    %v171 = vpop.permute.xlu0 %170
    %174 = vset.pattern.permute.xlu0 0
    %175 = vperm.xlu0 %174, %v84
    %v176 = vpop.permute.xlu0 %175
    %179 = vset.pattern.permute.xlu0 0
    %180 = vperm.xlu0 %179, %v85
    %v181 = vpop.permute.xlu0 %180
    %184 = vset.pattern.permute.xlu0 0
    %185 = vperm.xlu0 %184, %v86
    %v186 = vpop.permute.xlu0 %185
    %189 = vset.pattern.permute.xlu0 0
    %190 = vperm.xlu0 %189, %v87
    %v191 = vpop.permute.xlu0 %190
    %194 = vset.pattern.permute.xlu0 0
    %195 = vperm.xlu0 %194, %v88
    %v196 = vpop.permute.xlu0 %195
    %199 = vset.pattern.permute.xlu0 0
    %200 = vperm.xlu0 %199, %v89
    %v201 = vpop.permute.xlu0 %200
    %204 = vset.pattern.permute.xlu0 0
    %205 = vperm.xlu0 %204, %v90
    %v206 = vpop.permute.xlu0 %205
    %209 = vset.pattern.permute.xlu0 0
    %210 = vperm.xlu0 %209, %v91
    %v211 = vpop.permute.xlu0 %210
    %214 = vset.pattern.permute.xlu0 0
    %215 = vperm.xlu0 %214, %v92
    %v216 = vpop.permute.xlu0 %215
    %219 = vset.pattern.permute.xlu0 0
    %220 = vperm.xlu0 %219, %v93
    %v221 = vpop.permute.xlu0 %220
    %v223 = vmul.f32 %v110, %v146
    %v224 = vmul.f32 %v111, %v151
    %v225 = vmul.f32 %v112, %v156
    %v226 = vmul.f32 %v113, %v161
    %v227 = vmul.f32 %v114, %v166
    %v228 = vmul.f32 %v115, %v171
    %v229 = vmul.f32 %v116, %v176
    %v230 = vmul.f32 %v117, %v181
    %v231 = vmul.f32 %v118, %v186
    %v232 = vmul.f32 %v119, %v191
    %v233 = vmul.f32 %v120, %v196
    %v234 = vmul.f32 %v121, %v201
    %v235 = vmul.f32 %v122, %v206
    %v236 = vmul.f32 %v123, %v211
    %v237 = vmul.f32 %v124, %v216
    %v238 = vmul.f32 %v125, %v221
    %v239 = vpack.c.bf16 %v224, %v223
    %v240 = vpack.c.bf16 %v226, %v225
    %v241 = vpack.c.bf16 %v228, %v227
    %v242 = vpack.c.bf16 %v230, %v229
    %v243 = vpack.c.bf16 %v232, %v231
    %v244 = vpack.c.bf16 %v234, %v233
    %v245 = vpack.c.bf16 %v236, %v235
    %v246 = vpack.c.bf16 %v238, %v237
    %v263 = vunpack.c.l.b16 %v62
    %v264 = vunpack.c.l.b16 %v63
    %v265 = vunpack.c.l.b16 %v64
    %v266 = vunpack.c.l.b16 %v65
    %v267 = vunpack.c.l.b16 %v66
    %v268 = vunpack.c.l.b16 %v67
    %v269 = vunpack.c.l.b16 %v68
    %v270 = vunpack.c.l.b16 %v69
    %v271 = vunpack.c.l.b16 %v70
    %v272 = vunpack.c.l.b16 %v71
    %v273 = vunpack.c.l.b16 %v72
    %v274 = vunpack.c.l.b16 %v73
    %v275 = vunpack.c.l.b16 %v74
    %v276 = vunpack.c.l.b16 %v75
    %v277 = vunpack.c.l.b16 %v76
    %v278 = vunpack.c.l.b16 %v77
    %v279 = vpack.c.b16 %v264, %v263
    %v280 = vpack.c.b16 %v266, %v265
    %v281 = vpack.c.b16 %v268, %v267
    %v282 = vpack.c.b16 %v270, %v269
    %v283 = vpack.c.b16 %v272, %v271
    %v284 = vpack.c.b16 %v274, %v273
    %v285 = vpack.c.b16 %v276, %v275
    %v286 = vpack.c.b16 %v278, %v277
    %295 = vmatpush.bf16.msra.mxu0 %v246
    %296 = vmatpush.bf16.msra.mxu0 %v245
    %297 = vmatpush.bf16.msra.mxu0 %v244
    %298 = vmatpush.bf16.msra.mxu0 %v243
    %299 = vmatpush.bf16.msra.mxu0 %v242
    %300 = vmatpush.bf16.msra.mxu0 %v241
    %301 = vmatpush.bf16.msra.mxu0 %v240
    %302 = vmatpush.bf16.msra.mxu0 %v239
    %303 = vmatmul.bf16.gmra.mxu0 %v279
    %v304 = vpop.f32.mrf.mxu0
    %v305 = vadd.f32 0.0, %v304
    %v306 = vpop.f32.mrf.mxu0
    %v307 = vadd.f32 0.0, %v306
    %308 = vmatmul.bf16.gmra.mxu0 %v280
    %v309 = vpop.f32.mrf.mxu0
    %v310 = vadd.f32 0.0, %v309
    %v311 = vpop.f32.mrf.mxu0
    %v312 = vadd.f32 0.0, %v311
    %313 = vmatmul.bf16.gmra.mxu0 %v281
    %v314 = vpop.f32.mrf.mxu0
    %v315 = vadd.f32 0.0, %v314
    %v316 = vpop.f32.mrf.mxu0
    %v317 = vadd.f32 0.0, %v316
    %318 = vmatmul.bf16.gmra.mxu0 %v282
    %v319 = vpop.f32.mrf.mxu0
    %v320 = vadd.f32 0.0, %v319
    %v321 = vpop.f32.mrf.mxu0
    %v322 = vadd.f32 0.0, %v321
    %323 = vmatmul.bf16.gmra.mxu0 %v283
    %v324 = vpop.f32.mrf.mxu0
    %v325 = vadd.f32 0.0, %v324
    %v326 = vpop.f32.mrf.mxu0
    %v327 = vadd.f32 0.0, %v326
    %328 = vmatmul.bf16.gmra.mxu0 %v284
    %v329 = vpop.f32.mrf.mxu0
    %v330 = vadd.f32 0.0, %v329
    %v331 = vpop.f32.mrf.mxu0
    %v332 = vadd.f32 0.0, %v331
    %333 = vmatmul.bf16.gmra.mxu0 %v285
    %v334 = vpop.f32.mrf.mxu0
    %v335 = vadd.f32 0.0, %v334
    %v336 = vpop.f32.mrf.mxu0
    %v337 = vadd.f32 0.0, %v336
    %338 = vmatmul.bf16.gmra.mxu0 %v286
    %v339 = vpop.f32.mrf.mxu0
    %v340 = vadd.f32 0.0, %v339
    %v341 = vpop.f32.mrf.mxu0
    %v342 = vadd.f32 0.0, %v341
    %343 = vdwg.mxu0
    %345 = vset.pattern.permute.xlu0 0
    %346 = vperm.xlu0 %345, %v94
    %v347 = vpop.permute.xlu0 %346
    %350 = vset.pattern.permute.xlu0 0
    %351 = vperm.xlu0 %350, %v95
    %v352 = vpop.permute.xlu0 %351
    %355 = vset.pattern.permute.xlu0 0
    %356 = vperm.xlu0 %355, %v96
    %v357 = vpop.permute.xlu0 %356
    %360 = vset.pattern.permute.xlu0 0
    %361 = vperm.xlu0 %360, %v97
    %v362 = vpop.permute.xlu0 %361
    %365 = vset.pattern.permute.xlu0 0
    %366 = vperm.xlu0 %365, %v98
    %v367 = vpop.permute.xlu0 %366
    %370 = vset.pattern.permute.xlu0 0
    %371 = vperm.xlu0 %370, %v99
    %v372 = vpop.permute.xlu0 %371
    %375 = vset.pattern.permute.xlu0 0
    %376 = vperm.xlu0 %375, %v100
    %v377 = vpop.permute.xlu0 %376
    %380 = vset.pattern.permute.xlu0 0
    %381 = vperm.xlu0 %380, %v101
    %v382 = vpop.permute.xlu0 %381
    %385 = vset.pattern.permute.xlu0 0
    %386 = vperm.xlu0 %385, %v102
    %v387 = vpop.permute.xlu0 %386
    %390 = vset.pattern.permute.xlu0 0
    %391 = vperm.xlu0 %390, %v103
    %v392 = vpop.permute.xlu0 %391
    %395 = vset.pattern.permute.xlu0 0
    %396 = vperm.xlu0 %395, %v104
    %v397 = vpop.permute.xlu0 %396
    %400 = vset.pattern.permute.xlu0 0
    %401 = vperm.xlu0 %400, %v105
    %v402 = vpop.permute.xlu0 %401
    %405 = vset.pattern.permute.xlu0 0
    %406 = vperm.xlu0 %405, %v106
    %v407 = vpop.permute.xlu0 %406
    %410 = vset.pattern.permute.xlu0 0
    %411 = vperm.xlu0 %410, %v107
    %v412 = vpop.permute.xlu0 %411
    %415 = vset.pattern.permute.xlu0 0
    %416 = vperm.xlu0 %415, %v108
    %v417 = vpop.permute.xlu0 %416
    %420 = vset.pattern.permute.xlu0 0
    %421 = vperm.xlu0 %420, %v109
    %v422 = vpop.permute.xlu0 %421
    %v424 = vmul.f32 %v305, %v347
    %v425 = vmul.f32 %v307, %v352
    %v426 = vmul.f32 %v310, %v357
    %v427 = vmul.f32 %v312, %v362
    %v428 = vmul.f32 %v315, %v367
    %v429 = vmul.f32 %v317, %v372
    %v430 = vmul.f32 %v320, %v377
    %v431 = vmul.f32 %v322, %v382
    %v432 = vmul.f32 %v325, %v387
    %v433 = vmul.f32 %v327, %v392
    %v434 = vmul.f32 %v330, %v397
    %v435 = vmul.f32 %v332, %v402
    %v436 = vmul.f32 %v335, %v407
    %v437 = vmul.f32 %v337, %v412
    %v438 = vmul.f32 %v340, %v417
    %v439 = vmul.f32 %v342, %v422
    %v441 = vperm.slane %v142, 0
    %443 = vmatpush.msra.mxu0 %v141
    %444 = vmatpush.msra.mxu0 %v140
    %445 = vmatpush.msra.mxu0 %v139
    %446 = vmatpush.msra.mxu0 %v138
    %447 = vmatpush.msra.mxu0 %v137
    %448 = vmatpush.msra.mxu0 %v136
    %449 = vmatpush.msra.mxu0 %v135
    %450 = vmatpush.msra.mxu0 %v134
    %451 = vmatpush.msra.mxu0 %v133
    %452 = vmatpush.msra.mxu0 %v132
    %453 = vmatpush.msra.mxu0 %v131
    %454 = vmatpush.msra.mxu0 %v130
    %455 = vmatpush.msra.mxu0 %v129
    %456 = vmatpush.msra.mxu0 %v128
    %457 = vmatpush.msra.mxu0 %v127
    %458 = vmatpush.msra.mxu0 %v126
    %459 = vmatmul.f32.gmra.mxu0 %v424
    %v460 = vpop.f32.mrf.mxu0
    %v461 = vadd.f32 %v441, %v460
    %462 = vmatmul.f32.gmra.mxu0 %v425
    %v463 = vpop.f32.mrf.mxu0
    %v464 = vadd.f32 %v441, %v463
    %465 = vmatmul.f32.gmra.mxu0 %v426
    %v466 = vpop.f32.mrf.mxu0
    %v467 = vadd.f32 %v441, %v466
    %468 = vmatmul.f32.gmra.mxu0 %v427
    %v469 = vpop.f32.mrf.mxu0
    %v470 = vadd.f32 %v441, %v469
    %471 = vmatmul.f32.gmra.mxu0 %v428
    %v472 = vpop.f32.mrf.mxu0
    %v473 = vadd.f32 %v441, %v472
    %474 = vmatmul.f32.gmra.mxu0 %v429
    %v475 = vpop.f32.mrf.mxu0
    %v476 = vadd.f32 %v441, %v475
    %477 = vmatmul.f32.gmra.mxu0 %v430
    %v478 = vpop.f32.mrf.mxu0
    %v479 = vadd.f32 %v441, %v478
    %480 = vmatmul.f32.gmra.mxu0 %v431
    %v481 = vpop.f32.mrf.mxu0
    %v482 = vadd.f32 %v441, %v481
    %483 = vmatmul.f32.gmra.mxu0 %v432
    %v484 = vpop.f32.mrf.mxu0
    %v485 = vadd.f32 %v441, %v484
    %486 = vmatmul.f32.gmra.mxu0 %v433
    %v487 = vpop.f32.mrf.mxu0
    %v488 = vadd.f32 %v441, %v487
    %489 = vmatmul.f32.gmra.mxu0 %v434
    %v490 = vpop.f32.mrf.mxu0
    %v491 = vadd.f32 %v441, %v490
    %492 = vmatmul.f32.gmra.mxu0 %v435
    %v493 = vpop.f32.mrf.mxu0
    %v494 = vadd.f32 %v441, %v493
    %495 = vmatmul.f32.gmra.mxu0 %v436
    %v496 = vpop.f32.mrf.mxu0
    %v497 = vadd.f32 %v441, %v496
    %498 = vmatmul.f32.gmra.mxu0 %v437
    %v499 = vpop.f32.mrf.mxu0
    %v500 = vadd.f32 %v441, %v499
    %501 = vmatmul.f32.gmra.mxu0 %v438
    %v502 = vpop.f32.mrf.mxu0
    %v503 = vadd.f32 %v441, %v502
    %504 = vmatmul.f32.gmra.mxu0 %v439
    %v505 = vpop.f32.mrf.mxu0
    %v506 = vadd.f32 %v441, %v505
    %507 = vdwg.mxu0
    %v508 = vmax.f32 %v461, 0.0
    %v509 = vmax.f32 %v464, 0.0
    %v510 = vmax.f32 %v467, 0.0
    %v511 = vmax.f32 %v470, 0.0
    %v512 = vmax.f32 %v473, 0.0
    %v513 = vmax.f32 %v476, 0.0
    %v514 = vmax.f32 %v479, 0.0
    %v515 = vmax.f32 %v482, 0.0
    %v516 = vmax.f32 %v485, 0.0
    %v517 = vmax.f32 %v488, 0.0
    %v518 = vmax.f32 %v491, 0.0
    %v519 = vmax.f32 %v494, 0.0
    %v520 = vmax.f32 %v497, 0.0
    %v521 = vmax.f32 %v500, 0.0
    %v522 = vmax.f32 %v503, 0.0
    %v523 = vmax.f32 %v506, 0.0
    %v524 = vld [vmem:[#allocation5] sm:$0xff]
    %v525 = vld [vmem:[#allocation5 + $0x8] sm:$0xff]
    %v526 = vld [vmem:[#allocation5 + $0x10] sm:$0xff]
    %v527 = vld [vmem:[#allocation5 + $0x18] sm:$0xff]
    %v528 = vld [vmem:[#allocation5 + $0x20] sm:$0xff]
    %v529 = vld [vmem:[#allocation5 + $0x28] sm:$0xff]
    %v530 = vld [vmem:[#allocation5 + $0x30] sm:$0xff]
    %v531 = vld [vmem:[#allocation5 + $0x38] sm:$0xff]
    %v532 = vld [vmem:[#allocation5 + $0x40] sm:$0xff]
    %v533 = vld [vmem:[#allocation5 + $0x48] sm:$0xff]
    %v534 = vld [vmem:[#allocation5 + $0x50] sm:$0xff]
    %v535 = vld [vmem:[#allocation5 + $0x58] sm:$0xff]
    %v536 = vld [vmem:[#allocation5 + $0x60] sm:$0xff]
    %v537 = vld [vmem:[#allocation5 + $0x68] sm:$0xff]
    %v538 = vld [vmem:[#allocation5 + $0x70] sm:$0xff]
    %v539 = vld [vmem:[#allocation5 + $0x78] sm:$0xff]
    %v540 = vld [vmem:[%s7] sm:$0x1]
    %v541 = vmul.f32 %v508, %v146
    %v542 = vmul.f32 %v509, %v151
    %v543 = vmul.f32 %v510, %v156
    %v544 = vmul.f32 %v511, %v161
    %v545 = vmul.f32 %v512, %v166
    %v546 = vmul.f32 %v513, %v171
    %v547 = vmul.f32 %v514, %v176
    %v548 = vmul.f32 %v515, %v181
    %v549 = vmul.f32 %v516, %v186
    %v550 = vmul.f32 %v517, %v191
    %v551 = vmul.f32 %v518, %v196
    %v552 = vmul.f32 %v519, %v201
    %v553 = vmul.f32 %v520, %v206
    %v554 = vmul.f32 %v521, %v211
    %v555 = vmul.f32 %v522, %v216
    %v556 = vmul.f32 %v523, %v221
    %v557 = vpack.c.bf16 %v542, %v541
    %v558 = vpack.c.bf16 %v544, %v543
    %v559 = vpack.c.bf16 %v546, %v545
    %v560 = vpack.c.bf16 %v548, %v547
    %v561 = vpack.c.bf16 %v550, %v549
    %v562 = vpack.c.bf16 %v552, %v551
    %v563 = vpack.c.bf16 %v554, %v553
    %v564 = vpack.c.bf16 %v556, %v555
    %565 = vmatpush.bf16.msra.mxu0 %v564
    %566 = vmatpush.bf16.msra.mxu0 %v563
    %567 = vmatpush.bf16.msra.mxu0 %v562
    %568 = vmatpush.bf16.msra.mxu0 %v561
    %569 = vmatpush.bf16.msra.mxu0 %v560
    %570 = vmatpush.bf16.msra.mxu0 %v559
    %571 = vmatpush.bf16.msra.mxu0 %v558
    %572 = vmatpush.bf16.msra.mxu0 %v557
    %573 = vmatmul.bf16.gmra.mxu0 %v279
    %v574 = vpop.f32.mrf.mxu0
    %v575 = vadd.f32 0.0, %v574
    %v576 = vpop.f32.mrf.mxu0
    %v577 = vadd.f32 0.0, %v576
    %578 = vmatmul.bf16.gmra.mxu0 %v280
    %v579 = vpop.f32.mrf.mxu0
    %v580 = vadd.f32 0.0, %v579
    %v581 = vpop.f32.mrf.mxu0
    %v582 = vadd.f32 0.0, %v581
    %583 = vmatmul.bf16.gmra.mxu0 %v281
    %v584 = vpop.f32.mrf.mxu0
    %v585 = vadd.f32 0.0, %v584
    %v586 = vpop.f32.mrf.mxu0
    %v587 = vadd.f32 0.0, %v586
    %588 = vmatmul.bf16.gmra.mxu0 %v282
    %v589 = vpop.f32.mrf.mxu0
    %v590 = vadd.f32 0.0, %v589
    %v591 = vpop.f32.mrf.mxu0
    %v592 = vadd.f32 0.0, %v591
    %593 = vmatmul.bf16.gmra.mxu0 %v283
    %v594 = vpop.f32.mrf.mxu0
    %v595 = vadd.f32 0.0, %v594
    %v596 = vpop.f32.mrf.mxu0
    %v597 = vadd.f32 0.0, %v596
    %598 = vmatmul.bf16.gmra.mxu0 %v284
    %v599 = vpop.f32.mrf.mxu0
    %v600 = vadd.f32 0.0, %v599
    %v601 = vpop.f32.mrf.mxu0
    %v602 = vadd.f32 0.0, %v601
    %603 = vmatmul.bf16.gmra.mxu0 %v285
    %v604 = vpop.f32.mrf.mxu0
    %v605 = vadd.f32 0.0, %v604
    %v606 = vpop.f32.mrf.mxu0
    %v607 = vadd.f32 0.0, %v606
    %608 = vmatmul.bf16.gmra.mxu0 %v286
    %v609 = vpop.f32.mrf.mxu0
    %v610 = vadd.f32 0.0, %v609
    %v611 = vpop.f32.mrf.mxu0
    %v612 = vadd.f32 0.0, %v611
    %613 = vdwg.mxu0
    %v614 = vmul.f32 %v575, %v347
    %v615 = vmul.f32 %v577, %v352
    %v616 = vmul.f32 %v580, %v357
    %v617 = vmul.f32 %v582, %v362
    %v618 = vmul.f32 %v585, %v367
    %v619 = vmul.f32 %v587, %v372
    %v620 = vmul.f32 %v590, %v377
    %v621 = vmul.f32 %v592, %v382
    %v622 = vmul.f32 %v595, %v387
    %v623 = vmul.f32 %v597, %v392
    %v624 = vmul.f32 %v600, %v397
    %v625 = vmul.f32 %v602, %v402
    %v626 = vmul.f32 %v605, %v407
    %v627 = vmul.f32 %v607, %v412
    %v628 = vmul.f32 %v610, %v417
    %v629 = vmul.f32 %v612, %v422
    %v631 = vperm.slane %v540, 0
    %633 = vmatpush.msra.mxu0 %v539
    %634 = vmatpush.msra.mxu0 %v538
    %635 = vmatpush.msra.mxu0 %v537
    %636 = vmatpush.msra.mxu0 %v536
    %637 = vmatpush.msra.mxu0 %v535
    %638 = vmatpush.msra.mxu0 %v534
    %639 = vmatpush.msra.mxu0 %v533
    %640 = vmatpush.msra.mxu0 %v532
    %641 = vmatpush.msra.mxu0 %v531
    %642 = vmatpush.msra.mxu0 %v530
    %643 = vmatpush.msra.mxu0 %v529
    %644 = vmatpush.msra.mxu0 %v528
    %645 = vmatpush.msra.mxu0 %v527
    %646 = vmatpush.msra.mxu0 %v526
    %647 = vmatpush.msra.mxu0 %v525
    %648 = vmatpush.msra.mxu0 %v524
    %649 = vmatmul.f32.gmra.mxu0 %v614
    %v650 = vpop.f32.mrf.mxu0
    %v651 = vadd.f32 %v631, %v650
    %652 = vmatmul.f32.gmra.mxu0 %v615
    %v653 = vpop.f32.mrf.mxu0
    %v654 = vadd.f32 %v631, %v653
    %655 = vmatmul.f32.gmra.mxu0 %v616
    %v656 = vpop.f32.mrf.mxu0
    %v657 = vadd.f32 %v631, %v656
    %658 = vmatmul.f32.gmra.mxu0 %v617
    %v659 = vpop.f32.mrf.mxu0
    %v660 = vadd.f32 %v631, %v659
    %661 = vmatmul.f32.gmra.mxu0 %v618
    %v662 = vpop.f32.mrf.mxu0
    %v663 = vadd.f32 %v631, %v662
    %664 = vmatmul.f32.gmra.mxu0 %v619
    %v665 = vpop.f32.mrf.mxu0
    %v666 = vadd.f32 %v631, %v665
    %667 = vmatmul.f32.gmra.mxu0 %v620
    %v668 = vpop.f32.mrf.mxu0
    %v669 = vadd.f32 %v631, %v668
    %670 = vmatmul.f32.gmra.mxu0 %v621
    %v671 = vpop.f32.mrf.mxu0
    %v672 = vadd.f32 %v631, %v671
    %673 = vmatmul.f32.gmra.mxu0 %v622
    %v674 = vpop.f32.mrf.mxu0
    %v675 = vadd.f32 %v631, %v674
    %676 = vmatmul.f32.gmra.mxu0 %v623
    %v677 = vpop.f32.mrf.mxu0
    %v678 = vadd.f32 %v631, %v677
    %679 = vmatmul.f32.gmra.mxu0 %v624
    %v680 = vpop.f32.mrf.mxu0
    %v681 = vadd.f32 %v631, %v680
    %682 = vmatmul.f32.gmra.mxu0 %v625
    %v683 = vpop.f32.mrf.mxu0
    %v684 = vadd.f32 %v631, %v683
    %685 = vmatmul.f32.gmra.mxu0 %v626
    %v686 = vpop.f32.mrf.mxu0
    %v687 = vadd.f32 %v631, %v686
    %688 = vmatmul.f32.gmra.mxu0 %v627
    %v689 = vpop.f32.mrf.mxu0
    %v690 = vadd.f32 %v631, %v689
    %691 = vmatmul.f32.gmra.mxu0 %v628
    %v692 = vpop.f32.mrf.mxu0
    %v693 = vadd.f32 %v631, %v692
    %694 = vmatmul.f32.gmra.mxu0 %v629
    %v695 = vpop.f32.mrf.mxu0
    %v696 = vadd.f32 %v631, %v695
    %697 = vdwg.mxu0
    %698 = vst [vmem:[#allocation7] sm:$0xff] %v651
    %699 = vst [vmem:[#allocation7 + $0x8] sm:$0xff] %v654
    %700 = vst [vmem:[#allocation7 + $0x10] sm:$0xff] %v657
    %701 = vst [vmem:[#allocation7 + $0x18] sm:$0xff] %v660
    %702 = vst [vmem:[#allocation7 + $0x20] sm:$0xff] %v663
    %703 = vst [vmem:[#allocation7 + $0x28] sm:$0xff] %v666
    %704 = vst [vmem:[#allocation7 + $0x30] sm:$0xff] %v669
    %705 = vst [vmem:[#allocation7 + $0x38] sm:$0xff] %v672
    %706 = vst [vmem:[#allocation7 + $0x40] sm:$0xff] %v675
    %707 = vst [vmem:[#allocation7 + $0x48] sm:$0xff] %v678
    %708 = vst [vmem:[#allocation7 + $0x50] sm:$0xff] %v681
    %709 = vst [vmem:[#allocation7 + $0x58] sm:$0xff] %v684
    %710 = vst [vmem:[#allocation7 + $0x60] sm:$0xff] %v687
    %711 = vst [vmem:[#allocation7 + $0x68] sm:$0xff] %v690
    %712 = vst [vmem:[#allocation7 + $0x70] sm:$0xff] %v693
    %713 = vst [vmem:[#allocation7 + $0x78] sm:$0xff] %v696
    // Predicated region
    $region42: #{tpu_custom_call.1} parent=1 // pred_check
      _
    $region43: #{tpu_custom_call.1} parent=1 // pred_check_branch
      %715 = sbr.rel (0) target = $region45
    $region44: #{tpu_custom_call.1} parent=1 // pred_region
      %717 = vsyncadd [#allocation4], 0
      %s718 = sshll.u32 [#allocation7], 4
      %s719 = int_to_ptr.vmem [resolvable:$true] %s718
      %s720 = sshll.u32 %s8, 4
      %s721 = int_to_ptr.hbm [resolvable:$true] %s720
      %726 = dma.vmem_to_hbm [thread:$0]  %s719, 2048, %s721, [#allocation4], 128, 128, 8
    $region45: #{tpu_custom_call.1} parent=1 // pred_fallthru
      _
    // Predicated region
    $region46: #{tpu_custom_call.1} parent=1 // pred_check
      _
    $region47: #{tpu_custom_call.1} parent=1 // pred_check_branch
      %728 = sbr.rel (0) target = $region49
    $region48: #{tpu_custom_call.1} parent=1 // pred_region
      %730 = dma.done [#allocation4], 2048
    $region49: #{tpu_custom_call.1} parent=1 // pred_fallthru
      _
    %731 = vsyncpa [#allocation3], 1
    %732 = vsyncpa [#allocation6], 1
    %733 = vsyncpa [#allocation4], 1

</llo_original>
